<compile_context>
chip_gen: v5e
topology: v5e:2x2
jax: 0.10.0
libtpu: 0.0.40
codegen_flags: <defaults>
</compile_context>

<pallas_src>
import math
from functools import partial

import jax
import jax.numpy as jnp
from jax.experimental import pallas as pl
from jax.experimental.pallas import tpu as pltpu

THETA_DIM = 4      # D
X_DIM = 8          # L
HIDDEN = 64        # lampe MLP default hidden_features=(64, 64)
LANE = 128
_CHUNK = 512       # lanes per inner chunk (multiple of 128)


def _round_up(n, m):
    return ((n + m - 1) // m) * m


def _nre_mlp_kernel(th_ref, x_ref, w1t_ref, w1x_ref, b1_ref, w2_ref, b2_ref,
                    w3_ref, b3_ref, out_ref, *, x_resident, chunk):
    # Resident parameters (feature-major, batch-on-lanes convention):
    #   w1t: (H, D) f32, w1x: (H, L) f32, b1/b2: (H, 1) f32
    #   w2 : (H, H) bf16, w3: (1, H) bf16, b3: (1, 1) f32
    w1t = w1t_ref[...]
    w1x = w1x_ref[...]
    w2 = w2_ref[...]
    b2 = b2_ref[...]
    w3 = w3_ref[...]
    b3 = b3_ref[...]

    if x_resident:
        # Single (marginal) observation: fold its layer-1 contribution into
        # the bias once per grid step -> (H, 1).  VPU mul + XLU lane-reduce.
        b1 = b1_ref[...] + jnp.sum(w1x * x_ref[...], axis=1, keepdims=True)
    else:
        b1 = b1_ref[...]

    dn = (((1,), (1,)), ((), ()))          # contract the feature (minor) dims
    tb = out_ref.shape[-1]
    n_chunks = tb // chunk

    # Static chunk loop over the batch/lane axis: per-chunk (64, chunk)
    # activations stay register/VMEM-local instead of a (64, TILE_B) slab.
    for c in range(n_chunks):
        s = c * chunk
        th_c = th_ref[pl.ds(s, chunk), :]                       # (chunk, D) f32

        # Layer 1 (f32): (H, chunk) = w1t @ th_c^T (+ w1x @ x_c^T) + b1
        h = jax.lax.dot_general(w1t, th_c, dn,
                                preferred_element_type=jnp.float32)
        if not x_resident:
            x_c = x_ref[pl.ds(s, chunk), :]                     # (chunk, L) f32
            h = h + jax.lax.dot_general(w1x, x_c, dn,
                                        preferred_element_type=jnp.float32)
        h = jnp.maximum(h + b1, 0.0).astype(jnp.bfloat16)       # (H, chunk)

        # Layer 2 (bf16 MXU, f32 accumulate) + ReLU.
        h = jnp.dot(w2, h, preferred_element_type=jnp.float32) + b2
        h = jnp.maximum(h, 0.0).astype(jnp.bfloat16)            # (H, chunk)

        # Layer 3: lane-dense logit row (log-ratio), (1, chunk).
        o = jnp.dot(w3, h, preferred_element_type=jnp.float32) + b3
        out_ref[:, :, pl.ds(s, chunk)] = o[None]


def init_nre_params(key, theta_dim=THETA_DIM, x_dim=X_DIM, hidden=HIDDEN):
    """Deterministic init mimicking torch.nn.Linear (U[-1/sqrt(fan_in), ...])."""
    in_dim = theta_dim + x_dim
    dims = [(in_dim, hidden), (hidden, hidden), (hidden, 1)]
    params = {}
    keys = jax.random.split(key, 2 * len(dims))
    for i, (fi, fo) in enumerate(dims):
        bound = 1.0 / math.sqrt(fi)
        params[f"w{i + 1}"] = jax.random.uniform(
            keys[2 * i], (fi, fo), jnp.float32, -bound, bound)
        params[f"b{i + 1}"] = jax.random.uniform(
            keys[2 * i + 1], (1, fo), jnp.float32, -bound, bound)
    return params


def nre_forward(theta, x, params, tile_b=16384):
    """log r_phi(theta, x), shape (*,) — matches NRE.forward."""
    D = theta.shape[-1]
    L = x.shape[-1]

    # lampe.utils.broadcast(theta, x, ignore=1): broadcast all but last dim.
    batch_shape = jnp.broadcast_shapes(theta.shape[:-1], x.shape[:-1])
    B = 1
    for s in batch_shape:
        B *= int(s)

    if tuple(theta.shape[:-1]) != tuple(batch_shape):
        theta_flat = jnp.broadcast_to(theta, batch_shape + (D,)).reshape(-1, D)
    else:
        theta_flat = theta.reshape(-1, D)
    theta_flat = theta_flat.astype(jnp.float32)

    x_batch = 1
    for s in x.shape[:-1]:
        x_batch *= int(s)
    x_resident = (x_batch == 1)
    if x_resident:
        # Single observation: keep it tiny & resident, no HBM broadcast.
        x_in = x.reshape(1, L).astype(jnp.float32)
    else:
        if tuple(x.shape[:-1]) != tuple(batch_shape):
            # TODO(synk): the "all pairs" case (theta / x tiled along different
            # batch axes) could use a 2-D grid with separate index_maps instead
            # of materializing the broadcast in HBM.
            x_in = jnp.broadcast_to(x, batch_shape + (L,)).reshape(-1, L)
        else:
            x_in = x.reshape(-1, L)
        x_in = x_in.astype(jnp.float32)

    # Batch tile: multiple of _CHUNK lanes, clamped so large batches produce
    # >= 2 grid steps (lets the "parallel" axis shard across both v7x TCs).
    tile_b = max(_CHUNK, _round_up(int(tile_b), _CHUNK))
    tb = max(_CHUNK, min(tile_b, _round_up(-(-B // 2), _CHUNK)))
    if B < tb:  # only possible for tiny batches (< 512): cheap row pad
        theta_flat = jnp.pad(theta_flat, ((0, tb - B), (0, 0)))
        if not x_resident:
            x_in = jnp.pad(x_in, ((0, tb - B), (0, 0)))
    rows = max(B, tb)
    num_tiles = -(-rows // tb)   # cdiv; last block may overhang (discarded)

    # Parameters: layer 1 in f32, layers 2/3 bf16 (f32 biases / accumulation).
    w1 = params["w1"].astype(jnp.float32)                      # (D+L, H)
    w1t = w1[:D].T                                             # (H, D)
    w1x = w1[D:].T                                             # (H, L)
    b1_t = params["b1"].T.astype(jnp.float32)                  # (H, 1)
    w2_t = params["w2"].T.astype(jnp.bfloat16)                 # (H, H)
    b2_t = params["b2"].T.astype(jnp.float32)                  # (H, 1)
    w3_t = params["w3"].T.astype(jnp.bfloat16)                 # (1, H)
    b3_t = params["b3"].T.astype(jnp.float32)                  # (1, 1)

    theta_spec = pl.BlockSpec((tb, D), lambda i: (i, 0))
    if x_resident:
        x_spec = pl.BlockSpec((1, L), lambda i: (0, 0))
    else:
        x_spec = pl.BlockSpec((tb, L), lambda i: (i, 0))

    def resident(a):
        return pl.BlockSpec(a.shape, lambda i: (0,) * a.ndim)

    kernel = partial(_nre_mlp_kernel, x_resident=x_resident, chunk=_CHUNK)

    out = pl.pallas_call(
        kernel,
        out_shape=jax.ShapeDtypeStruct((num_tiles, 1, tb), jnp.float32),
        grid=(num_tiles,),
        in_specs=[
            theta_spec, x_spec,
            resident(w1t), resident(w1x), resident(b1_t),
            resident(w2_t), resident(b2_t),
            resident(w3_t), resident(b3_t),
        ],
        out_specs=pl.BlockSpec((1, 1, tb), lambda i: (i, 0, 0)),
        compiler_params=pltpu.CompilerParams(
            dimension_semantics=("parallel",),
            vmem_limit_bytes=50 * 1024 * 1024),
    )(theta_flat, x_in, w1t, w1x, b1_t, w2_t, b2_t, w3_t, b3_t)

    logits = out.reshape(-1)[:B]                               # drop pad cols
    return logits.reshape(batch_shape)                         # (*,)


def nre_forward_ref(theta, x, params):
    """Pure-JAX reference (f32 layer 1, bf16 matmul inputs for layers 2/3)."""
    batch_shape = jnp.broadcast_shapes(theta.shape[:-1], x.shape[:-1])
    theta_b = jnp.broadcast_to(theta, batch_shape + (theta.shape[-1],))
    x_b = jnp.broadcast_to(x, batch_shape + (x.shape[-1],))
    z = jnp.concatenate([theta_b, x_b], axis=-1).astype(jnp.float32)
    h = jnp.dot(z, params["w1"], precision="highest",
                preferred_element_type=jnp.float32) + params["b1"]
    h = jnp.maximum(h, 0.0)
    h = jnp.dot(h.astype(jnp.bfloat16), params["w2"].astype(jnp.bfloat16),
                preferred_element_type=jnp.float32) + params["b2"]
    h = jnp.maximum(h, 0.0)
    o = jnp.dot(h.astype(jnp.bfloat16), params["w3"].astype(jnp.bfloat16),
                preferred_element_type=jnp.float32) + params["b3"]
    return o[..., 0]


if __name__ == "__main__":
    key = jax.random.PRNGKey(0)
    k_params, k_theta, k_x, k_theta2, k_x2, k_theta3 = jax.random.split(key, 6)

    params = init_nre_params(k_params)

    # Case 1: plain small batch, theta and x share batch dims.
    B = 8
    theta = jax.random.normal(k_theta, (B, THETA_DIM), jnp.float32)
    x = jax.random.normal(k_x, (B, X_DIM), jnp.float32)
    log_r = jax.block_until_ready(nre_forward(theta, x, params))
    ref = nre_forward_ref(theta, x, params)
    assert log_r.shape == (B,), log_r.shape
    assert jnp.allclose(log_r, ref, atol=1e-2, rtol=1e-2), (log_r, ref)

    # Case 2: broadcast batch dims, as NRE.forward allows.
    theta2 = jax.random.normal(k_theta2, (3, 1, THETA_DIM), jnp.float32)
    x2 = jax.random.normal(k_x2, (5, X_DIM), jnp.float32)
    log_r2 = jax.block_until_ready(nre_forward(theta2, x2, params))
    ref2 = nre_forward_ref(theta2, x2, params)
    assert log_r2.shape == (3, 5), log_r2.shape
    assert jnp.allclose(log_r2, ref2, atol=1e-2, rtol=1e-2), (log_r2, ref2)

    # Case 3: single (marginal) observation -> x stays resident in the kernel.
    theta3 = jax.random.normal(k_theta3, (6, THETA_DIM), jnp.float32)
    x3 = jax.random.normal(k_x, (X_DIM,), jnp.float32)
    log_r3 = jax.block_until_ready(nre_forward(theta3, x3, params))
    ref3 = nre_forward_ref(theta3, x3, params)
    assert log_r3.shape == (6,), log_r3.shape
    assert jnp.allclose(log_r3, ref3, atol=1e-2, rtol=1e-2), (log_r3, ref3)

    print("KERNEL_OK")
</pallas_src>

<mosaic_0001>
module attributes {stable_mosaic.version = 11 : i64} {
  func.func @_nre_mlp_kernel(%arg0: i32, %arg1: memref<512x4xf32, #tpu.memory_space<vmem>>, %arg2: memref<512x8xf32, #tpu.memory_space<vmem>>, %arg3: memref<64x4xf32, #tpu.memory_space<vmem>>, %arg4: memref<64x8xf32, #tpu.memory_space<vmem>>, %arg5: memref<64x1xf32, #tpu.memory_space<vmem>>, %arg6: memref<64x64xbf16, #tpu.memory_space<vmem>>, %arg7: memref<64x1xf32, #tpu.memory_space<vmem>>, %arg8: memref<1x64xbf16, #tpu.memory_space<vmem>>, %arg9: memref<1x1xf32, #tpu.memory_space<vmem>>, %arg10: memref<1x1x512xf32, #tpu.memory_space<vmem>>) attributes {dimension_semantics = [#tpu.dimension_semantics<parallel>], iteration_bounds = array<i64: 1>, scalar_prefetch = 0 : i64, scratch_operands = 0 : i64, tpu.core_type = #tpu.core_type<tc>, window_params = [{transform_indices = @transform_0, window_bounds = array<i64: 512, 4>}, {transform_indices = @transform_1, window_bounds = array<i64: 512, 8>}, {pipeline_mode = #tpu.pipeline_mode<synchronous>, transform_indices = @transform_2, window_bounds = array<i64: 64, 4>}, {pipeline_mode = #tpu.pipeline_mode<synchronous>, transform_indices = @transform_3, window_bounds = array<i64: 64, 8>}, {pipeline_mode = #tpu.pipeline_mode<synchronous>, transform_indices = @transform_4, window_bounds = array<i64: 64, 1>}, {pipeline_mode = #tpu.pipeline_mode<synchronous>, transform_indices = @transform_5, window_bounds = array<i64: 64, 64>}, {pipeline_mode = #tpu.pipeline_mode<synchronous>, transform_indices = @transform_6, window_bounds = array<i64: 64, 1>}, {pipeline_mode = #tpu.pipeline_mode<synchronous>, transform_indices = @transform_7, window_bounds = array<i64: 1, 64>}, {pipeline_mode = #tpu.pipeline_mode<synchronous>, transform_indices = @transform_8, window_bounds = array<i64: 1, 1>}, {transform_indices = @transform_9, window_bounds = array<i64: 1, 1, 512>}]} {
    %c0 = arith.constant 0 : index
    %c0_0 = arith.constant 0 : index
    %0 = vector.load %arg3[%c0, %c0_0] : memref<64x4xf32, #tpu.memory_space<vmem>>, vector<64x4xf32>
    %c0_1 = arith.constant 0 : index
    %c0_2 = arith.constant 0 : index
    %1 = vector.load %arg4[%c0_1, %c0_2] : memref<64x8xf32, #tpu.memory_space<vmem>>, vector<64x8xf32>
    %c0_3 = arith.constant 0 : index
    %c0_4 = arith.constant 0 : index
    %2 = vector.load %arg6[%c0_3, %c0_4] : memref<64x64xbf16, #tpu.memory_space<vmem>>, vector<64x64xbf16>
    %c0_5 = arith.constant 0 : index
    %c0_6 = arith.constant 0 : index
    %3 = vector.load %arg7[%c0_5, %c0_6] : memref<64x1xf32, #tpu.memory_space<vmem>>, vector<64x1xf32>
    %c0_7 = arith.constant 0 : index
    %c0_8 = arith.constant 0 : index
    %4 = vector.load %arg8[%c0_7, %c0_8] : memref<1x64xbf16, #tpu.memory_space<vmem>>, vector<1x64xbf16>
    %c0_9 = arith.constant 0 : index
    %c0_10 = arith.constant 0 : index
    %5 = vector.load %arg9[%c0_9, %c0_10] : memref<1x1xf32, #tpu.memory_space<vmem>>, vector<1x1xf32>
    %c0_11 = arith.constant 0 : index
    %c0_12 = arith.constant 0 : index
    %6 = vector.load %arg5[%c0_11, %c0_12] : memref<64x1xf32, #tpu.memory_space<vmem>>, vector<64x1xf32>
    %c0_13 = arith.constant 0 : index
    %c0_14 = arith.constant 0 : index
    %7 = vector.load %arg1[%c0_13, %c0_14] : memref<512x4xf32, #tpu.memory_space<vmem>>, vector<512x4xf32>
    %cst = arith.constant dense<0.000000e+00> : vector<64x512xf32>
    %8 = tpu.matmul %0, %7, %cst {dimension_numbers = #tpu.dot_dimension_numbers<[1], [1], [0], [0], [0, 0, 1, 0], [], []>} : vector<64x4xf32>, vector<512x4xf32>, vector<64x512xf32> -> vector<64x512xf32>
    %c0_15 = arith.constant 0 : index
    %c0_16 = arith.constant 0 : index
    %9 = vector.load %arg2[%c0_15, %c0_16] : memref<512x8xf32, #tpu.memory_space<vmem>>, vector<512x8xf32>
    %cst_17 = arith.constant dense<0.000000e+00> : vector<64x512xf32>
    %10 = tpu.matmul %1, %9, %cst_17 {dimension_numbers = #tpu.dot_dimension_numbers<[1], [1], [0], [0], [0, 0, 1, 0], [], []>} : vector<64x8xf32>, vector<512x8xf32>, vector<64x512xf32> -> vector<64x512xf32>
    %11 = arith.addf %8, %10 : vector<64x512xf32>
    %12 = vector.broadcast %6 : vector<64x1xf32> to vector<64x512xf32>
    %13 = arith.addf %11, %12 : vector<64x512xf32>
    %cst_18 = arith.constant 0.000000e+00 : f32
    %14 = vector.broadcast %cst_18 : f32 to vector<64x512xf32>
    %15 = arith.maximumf %13, %14 : vector<64x512xf32>
    %16 = arith.truncf %15 : vector<64x512xf32> to vector<64x512xbf16>
    %cst_19 = arith.constant dense<0.000000e+00> : vector<64x512xf32>
    %17 = tpu.matmul %2, %16, %cst_19 {dimension_numbers = #tpu.dot_dimension_numbers<[1], [0], [0], [1], [0, 0, 1, 1], [], []>} : vector<64x64xbf16>, vector<64x512xbf16>, vector<64x512xf32> -> vector<64x512xf32>
    %18 = vector.broadcast %3 : vector<64x1xf32> to vector<64x512xf32>
    %19 = arith.addf %17, %18 : vector<64x512xf32>
    %cst_20 = arith.constant 0.000000e+00 : f32
    %20 = vector.broadcast %cst_20 : f32 to vector<64x512xf32>
    %21 = arith.maximumf %19, %20 : vector<64x512xf32>
    %22 = arith.truncf %21 : vector<64x512xf32> to vector<64x512xbf16>
    %cst_21 = arith.constant dense<0.000000e+00> : vector<1x512xf32>
    %23 = tpu.matmul %4, %22, %cst_21 {dimension_numbers = #tpu.dot_dimension_numbers<[1], [0], [0], [1], [0, 0, 1, 1], [], []>} : vector<1x64xbf16>, vector<64x512xbf16>, vector<1x512xf32> -> vector<1x512xf32>
    %24 = vector.broadcast %5 : vector<1x1xf32> to vector<1x512xf32>
    %25 = arith.addf %23, %24 : vector<1x512xf32>
    %26 = vector.shape_cast %25 : vector<1x512xf32> to vector<1x1x512xf32>
    %c0_22 = arith.constant 0 : index
    %c0_23 = arith.constant 0 : index
    %c0_24 = arith.constant 0 : index
    %27 = vector.load %arg10[%c0_22, %c0_23, %c0_24] : memref<1x1x512xf32, #tpu.memory_space<vmem>>, vector<1x1x512xf32>
    tpu.vector_store %arg10[%c0_22, %c0_23, %c0_24], %26 {strides = array<i32>} : memref<1x1x512xf32, #tpu.memory_space<vmem>>, vector<1x1x512xf32>,
    return
  }
  func.func @transform_0(%arg0: i32) -> (i32, i32) {
    %c0_i32 = arith.constant 0 : i32
    %c0_i32_0 = arith.constant 0 : i32
    return %arg0, %c0_i32 : i32, i32
  }
  func.func @transform_1(%arg0: i32) -> (i32, i32) {
    %c0_i32 = arith.constant 0 : i32
    %c0_i32_0 = arith.constant 0 : i32
    return %arg0, %c0_i32 : i32, i32
  }
  func.func @transform_2(%arg0: i32) -> (i32, i32) {
    %c0_i32 = arith.constant 0 : i32
    %c0_i32_0 = arith.constant 0 : i32
    %c0_i32_1 = arith.constant 0 : i32
    return %c0_i32, %c0_i32_0 : i32, i32
  }
  func.func @transform_3(%arg0: i32) -> (i32, i32) {
    %c0_i32 = arith.constant 0 : i32
    %c0_i32_0 = arith.constant 0 : i32
    %c0_i32_1 = arith.constant 0 : i32
    return %c0_i32, %c0_i32_0 : i32, i32
  }
  func.func @transform_4(%arg0: i32) -> (i32, i32) {
    %c0_i32 = arith.constant 0 : i32
    %c0_i32_0 = arith.constant 0 : i32
    %c0_i32_1 = arith.constant 0 : i32
    return %c0_i32, %c0_i32_0 : i32, i32
  }
  func.func @transform_5(%arg0: i32) -> (i32, i32) {
    %c0_i32 = arith.constant 0 : i32
    %c0_i32_0 = arith.constant 0 : i32
    %c0_i32_1 = arith.constant 0 : i32
    return %c0_i32, %c0_i32_0 : i32, i32
  }
  func.func @transform_6(%arg0: i32) -> (i32, i32) {
    %c0_i32 = arith.constant 0 : i32
    %c0_i32_0 = arith.constant 0 : i32
    %c0_i32_1 = arith.constant 0 : i32
    return %c0_i32, %c0_i32_0 : i32, i32
  }
  func.func @transform_7(%arg0: i32) -> (i32, i32) {
    %c0_i32 = arith.constant 0 : i32
    %c0_i32_0 = arith.constant 0 : i32
    %c0_i32_1 = arith.constant 0 : i32
    return %c0_i32, %c0_i32_0 : i32, i32
  }
  func.func @transform_8(%arg0: i32) -> (i32, i32) {
    %c0_i32 = arith.constant 0 : i32
    %c0_i32_0 = arith.constant 0 : i32
    %c0_i32_1 = arith.constant 0 : i32
    return %c0_i32, %c0_i32_0 : i32, i32
  }
  func.func @transform_9(%arg0: i32) -> (i32, i32, i32) {
    %c0_i32 = arith.constant 0 : i32
    %c0_i32_0 = arith.constant 0 : i32
    %c0_i32_1 = arith.constant 0 : i32
    return %arg0, %c0_i32, %c0_i32_0 : i32, i32, i32
  }
}

</mosaic_0001>

<llo_original>
// kernel: tpu_custom_call.1
$region0: #{tpu_custom_call.1}
  #allocation0 [shape = 'u32[]', space=smem, size = 0x4, offset = 0x4, fixed_abs, tag = 'smem constant byte address 0x4 - core index']
  #allocation1 [shape = 'u32[72,128]{1,0:T(1,128)}', space=vmem, size = 0x9000, scoped, tag = 'internal scratch']
  #allocation2 [shape = 'f32[1,1]{1,0:T(1,128)S(1)}', space=vmem, size = 0x200, scoped, tag = 'scoped memory for tpu_custom_call.1']
  %s0 = inlined_call_operand.vmem [shape: f32[512,4], index: 0, kind: input, shape index: {}]
  %s1 = inlined_call_operand.vmem [shape: f32[512,8], index: 1, kind: input, shape index: {}]
  %s2 = inlined_call_operand.vmem [shape: f32[64,4], index: 2, kind: input, shape index: {}]
  %s3 = inlined_call_operand.vmem [shape: f32[64,8], index: 3, kind: input, shape index: {}]
  %s4 = inlined_call_operand.vmem [shape: f32[64,1], index: 4, kind: input, shape index: {}]
  %s5 = inlined_call_operand.vmem [shape: bf16[64,64], index: 5, kind: input, shape index: {}]
  %s6 = inlined_call_operand.vmem [shape: f32[64,1], index: 6, kind: input, shape index: {}]
  %s7 = inlined_call_operand.vmem [shape: bf16[1,64], index: 7, kind: input, shape index: {}]
  %s8 = inlined_call_operand.<no memory space> [shape: f32[1,1], index: 8, kind: input, shape index: {}]
  %s9 = inlined_call_operand.hbm [shape: f32[1,1,512], index: 9, kind: output, shape index: {}]
  %s10 = sld [smem:[#allocation0]]
  $region46: #{tpu_custom_call.1} parent=0
    _
  %s12 = ssub.s32 1, %s10
  %s13 = scalar_select 0, %s12, %s10
  %v14 = vstv %s8
  %15 = vst [vmem:[#allocation2] sm:$0x1] %v14
  $region1: #{tpu_custom_call.1} parent=0
    #allocation3 [shape = 'u8[2048]{0}', space=vmem, size = 0x800, scoped, tag = 'output window, operand 0, single buffered']
    #allocation4 [shape = 's32[1]{0}', space=sflag, size = 0x4, scoped, tag = 'scoped memory for tpu_custom_call.1']
    %16 = vsyncpa [#allocation4], 0
    // Predicated region
    $region2: #{tpu_custom_call.1} parent=1 // pred_check
      _
    $region3: #{tpu_custom_call.1} parent=1 // pred_check_branch
      %18 = sbr.rel (0) target = $region5
    $region4: #{tpu_custom_call.1} parent=1 // pred_region
      _
    $region5: #{tpu_custom_call.1} parent=1 // pred_fallthru
      _
    // Predicated region
    $region6: #{tpu_custom_call.1} parent=1 // pred_check
      _
    $region7: #{tpu_custom_call.1} parent=1 // pred_check_branch
      %20 = sbr.rel (0) target = $region9
    $region8: #{tpu_custom_call.1} parent=1 // pred_region
      _
    $region9: #{tpu_custom_call.1} parent=1 // pred_fallthru
      _
    // Predicated region
    $region10: #{tpu_custom_call.1} parent=1 // pred_check
      _
    $region11: #{tpu_custom_call.1} parent=1 // pred_check_branch
      %22 = sbr.rel (0) target = $region13
    $region12: #{tpu_custom_call.1} parent=1 // pred_region
      _
    $region13: #{tpu_custom_call.1} parent=1 // pred_fallthru
      _
    // Predicated region
    $region14: #{tpu_custom_call.1} parent=1 // pred_check
      _
    $region15: #{tpu_custom_call.1} parent=1 // pred_check_branch
      %24 = sbr.rel (0) target = $region17
    $region16: #{tpu_custom_call.1} parent=1 // pred_region
      _
    $region17: #{tpu_custom_call.1} parent=1 // pred_fallthru
      _
    // Predicated region
    $region18: #{tpu_custom_call.1} parent=1 // pred_check
      _
    $region19: #{tpu_custom_call.1} parent=1 // pred_check_branch
      %26 = sbr.rel (0) target = $region21
    $region20: #{tpu_custom_call.1} parent=1 // pred_region
      _
    $region21: #{tpu_custom_call.1} parent=1 // pred_fallthru
      _
    // Predicated region
    $region22: #{tpu_custom_call.1} parent=1 // pred_check
      _
    $region23: #{tpu_custom_call.1} parent=1 // pred_check_branch
      %28 = sbr.rel (0) target = $region25
    $region24: #{tpu_custom_call.1} parent=1 // pred_region
      _
    $region25: #{tpu_custom_call.1} parent=1 // pred_fallthru
      _
    // Predicated region
    $region26: #{tpu_custom_call.1} parent=1 // pred_check
      _
    $region27: #{tpu_custom_call.1} parent=1 // pred_check_branch
      %30 = sbr.rel (0) target = $region29
    $region28: #{tpu_custom_call.1} parent=1 // pred_region
      _
    $region29: #{tpu_custom_call.1} parent=1 // pred_fallthru
      _
    // Predicated region
    $region30: #{tpu_custom_call.1} parent=1 // pred_check
      _
    $region31: #{tpu_custom_call.1} parent=1 // pred_check_branch
      %32 = sbr.rel (0) target = $region33
    $region32: #{tpu_custom_call.1} parent=1 // pred_region
      _
    $region33: #{tpu_custom_call.1} parent=1 // pred_fallthru
      _
    // Predicated region
    $region34: #{tpu_custom_call.1} parent=1 // pred_check
      _
    $region35: #{tpu_custom_call.1} parent=1 // pred_check_branch
      %34 = sbr.rel (0) target = $region37
    $region36: #{tpu_custom_call.1} parent=1 // pred_region
      _
    $region37: #{tpu_custom_call.1} parent=1 // pred_fallthru
      _
    %v36 = vld [vmem:[%s2] sm:$0xff]
    %v37 = vld [vmem:[%s2 + $0x8] sm:$0xff]
    %v38 = vld [vmem:[%s2 + $0x10] sm:$0xff]
    %v39 = vld [vmem:[%s2 + $0x18] sm:$0xff]
    %v40 = vld [vmem:[%s2 + $0x20] sm:$0xff]
    %v41 = vld [vmem:[%s2 + $0x28] sm:$0xff]
    %v42 = vld [vmem:[%s2 + $0x30] sm:$0xff]
    %v43 = vld [vmem:[%s2 + $0x38] sm:$0xff]
    %v44 = vld [vmem:[%s3] sm:$0xff]
    %v45 = vld [vmem:[%s3 + $0x8] sm:$0xff]
    %v46 = vld [vmem:[%s3 + $0x10] sm:$0xff]
    %v47 = vld [vmem:[%s3 + $0x18] sm:$0xff]
    %v48 = vld [vmem:[%s3 + $0x20] sm:$0xff]
    %v49 = vld [vmem:[%s3 + $0x28] sm:$0xff]
    %v50 = vld [vmem:[%s3 + $0x30] sm:$0xff]
    %v51 = vld [vmem:[%s3 + $0x38] sm:$0xff]
    %v52 = vld [vmem:[%s5] sm:$0xf]
    %v53 = vld [vmem:[%s5 + $0x4] sm:$0xf]
    %v54 = vld [vmem:[%s5 + $0x8] sm:$0xf]
    %v55 = vld [vmem:[%s5 + $0xc] sm:$0xf]
    %v56 = vld [vmem:[%s5 + $0x10] sm:$0xf]
    %v57 = vld [vmem:[%s5 + $0x14] sm:$0xf]
    %v58 = vld [vmem:[%s5 + $0x18] sm:$0xf]
    %v59 = vld [vmem:[%s5 + $0x1c] sm:$0xf]
    %v60 = vld [vmem:[%s6] sm:$0xff]
    %v61 = vld [vmem:[%s6 + $0x8] sm:$0xff]
    %v62 = vld [vmem:[%s6 + $0x10] sm:$0xff]
    %v63 = vld [vmem:[%s6 + $0x18] sm:$0xff]
    %v64 = vld [vmem:[%s6 + $0x20] sm:$0xff]
    %v65 = vld [vmem:[%s6 + $0x28] sm:$0xff]
    %v66 = vld [vmem:[%s6 + $0x30] sm:$0xff]
    %v67 = vld [vmem:[%s6 + $0x38] sm:$0xff]
    %v68 = vld [vmem:[%s7] sm:$0x1]
    %v69 = vld [vmem:[#allocation2] sm:$0x1]
    %v70 = vld [vmem:[%s4] sm:$0xff]
    %v71 = vld [vmem:[%s4 + $0x8] sm:$0xff]
    %v72 = vld [vmem:[%s4 + $0x10] sm:$0xff]
    %v73 = vld [vmem:[%s4 + $0x18] sm:$0xff]
    %v74 = vld [vmem:[%s4 + $0x20] sm:$0xff]
    %v75 = vld [vmem:[%s4 + $0x28] sm:$0xff]
    %v76 = vld [vmem:[%s4 + $0x30] sm:$0xff]
    %v77 = vld [vmem:[%s4 + $0x38] sm:$0xff]
    %v78 = vld [vmem:[%s0] sm:$0xff]
    %v79 = vld [vmem:[%s0 + $0x8] sm:$0xff]
    %v80 = vld [vmem:[%s0 + $0x10] sm:$0xff]
    %v81 = vld [vmem:[%s0 + $0x18] sm:$0xff]
    %v82 = vld [vmem:[%s0 + $0x20] sm:$0xff]
    %v83 = vld [vmem:[%s0 + $0x28] sm:$0xff]
    %v84 = vld [vmem:[%s0 + $0x30] sm:$0xff]
    %v85 = vld [vmem:[%s0 + $0x38] sm:$0xff]
    %v86 = vld [vmem:[%s0 + $0x40] sm:$0xff]
    %v87 = vld [vmem:[%s0 + $0x48] sm:$0xff]
    %v88 = vld [vmem:[%s0 + $0x50] sm:$0xff]
    %v89 = vld [vmem:[%s0 + $0x58] sm:$0xff]
    %v90 = vld [vmem:[%s0 + $0x60] sm:$0xff]
    %v91 = vld [vmem:[%s0 + $0x68] sm:$0xff]
    %v92 = vld [vmem:[%s0 + $0x70] sm:$0xff]
    %v93 = vld [vmem:[%s0 + $0x78] sm:$0xff]
    %v94 = vld [vmem:[%s0 + $0x80] sm:$0xff]
    %v95 = vld [vmem:[%s0 + $0x88] sm:$0xff]
    %v96 = vld [vmem:[%s0 + $0x90] sm:$0xff]
    %v97 = vld [vmem:[%s0 + $0x98] sm:$0xff]
    %v98 = vld [vmem:[%s0 + $0xa0] sm:$0xff]
    %v99 = vld [vmem:[%s0 + $0xa8] sm:$0xff]
    %v100 = vld [vmem:[%s0 + $0xb0] sm:$0xff]
    %v101 = vld [vmem:[%s0 + $0xb8] sm:$0xff]
    %v102 = vld [vmem:[%s0 + $0xc0] sm:$0xff]
    %v103 = vld [vmem:[%s0 + $0xc8] sm:$0xff]
    %v104 = vld [vmem:[%s0 + $0xd0] sm:$0xff]
    %v105 = vld [vmem:[%s0 + $0xd8] sm:$0xff]
    %v106 = vld [vmem:[%s0 + $0xe0] sm:$0xff]
    %v107 = vld [vmem:[%s0 + $0xe8] sm:$0xff]
    %v108 = vld [vmem:[%s0 + $0xf0] sm:$0xff]
    %v109 = vld [vmem:[%s0 + $0xf8] sm:$0xff]
    %v110 = vld [vmem:[%s0 + $0x100] sm:$0xff]
    %v111 = vld [vmem:[%s0 + $0x108] sm:$0xff]
    %v112 = vld [vmem:[%s0 + $0x110] sm:$0xff]
    %v113 = vld [vmem:[%s0 + $0x118] sm:$0xff]
    %v114 = vld [vmem:[%s0 + $0x120] sm:$0xff]
    %v115 = vld [vmem:[%s0 + $0x128] sm:$0xff]
    %v116 = vld [vmem:[%s0 + $0x130] sm:$0xff]
    %v117 = vld [vmem:[%s0 + $0x138] sm:$0xff]
    %v118 = vld [vmem:[%s0 + $0x140] sm:$0xff]
    %v119 = vld [vmem:[%s0 + $0x148] sm:$0xff]
    %v120 = vld [vmem:[%s0 + $0x150] sm:$0xff]
    %v121 = vld [vmem:[%s0 + $0x158] sm:$0xff]
    %v122 = vld [vmem:[%s0 + $0x160] sm:$0xff]
    %v123 = vld [vmem:[%s0 + $0x168] sm:$0xff]
    %v124 = vld [vmem:[%s0 + $0x170] sm:$0xff]
    %v125 = vld [vmem:[%s0 + $0x178] sm:$0xff]
    %v126 = vld [vmem:[%s0 + $0x180] sm:$0xff]
    %v127 = vld [vmem:[%s0 + $0x188] sm:$0xff]
    %v128 = vld [vmem:[%s0 + $0x190] sm:$0xff]
    %v129 = vld [vmem:[%s0 + $0x198] sm:$0xff]
    %v130 = vld [vmem:[%s0 + $0x1a0] sm:$0xff]
    %v131 = vld [vmem:[%s0 + $0x1a8] sm:$0xff]
    %v132 = vld [vmem:[%s0 + $0x1b0] sm:$0xff]
    %v133 = vld [vmem:[%s0 + $0x1b8] sm:$0xff]
    %v134 = vld [vmem:[%s0 + $0x1c0] sm:$0xff]
    %v135 = vld [vmem:[%s0 + $0x1c8] sm:$0xff]
    %v136 = vld [vmem:[%s0 + $0x1d0] sm:$0xff]
    %v137 = vld [vmem:[%s0 + $0x1d8] sm:$0xff]
    %v138 = vld [vmem:[%s0 + $0x1e0] sm:$0xff]
    %v139 = vld [vmem:[%s0 + $0x1e8] sm:$0xff]
    %v140 = vld [vmem:[%s0 + $0x1f0] sm:$0xff]
    %v141 = vld [vmem:[%s0 + $0x1f8] sm:$0xff]
    %v142 = vld [vmem:[%s1] sm:$0xff]
    %v143 = vld [vmem:[%s1 + $0x8] sm:$0xff]
    %v144 = vld [vmem:[%s1 + $0x10] sm:$0xff]
    %v145 = vld [vmem:[%s1 + $0x18] sm:$0xff]
    %v146 = vld [vmem:[%s1 + $0x20] sm:$0xff]
    %v147 = vld [vmem:[%s1 + $0x28] sm:$0xff]
    %v148 = vld [vmem:[%s1 + $0x30] sm:$0xff]
    %v149 = vld [vmem:[%s1 + $0x38] sm:$0xff]
    %v150 = vld [vmem:[%s1 + $0x40] sm:$0xff]
    %v151 = vld [vmem:[%s1 + $0x48] sm:$0xff]
    %v152 = vld [vmem:[%s1 + $0x50] sm:$0xff]
    %v153 = vld [vmem:[%s1 + $0x58] sm:$0xff]
    %v154 = vld [vmem:[%s1 + $0x60] sm:$0xff]
    %v155 = vld [vmem:[%s1 + $0x68] sm:$0xff]
    %v156 = vld [vmem:[%s1 + $0x70] sm:$0xff]
    %v157 = vld [vmem:[%s1 + $0x78] sm:$0xff]
    %v158 = vld [vmem:[%s1 + $0x80] sm:$0xff]
    %v159 = vld [vmem:[%s1 + $0x88] sm:$0xff]
    %v160 = vld [vmem:[%s1 + $0x90] sm:$0xff]
    %v161 = vld [vmem:[%s1 + $0x98] sm:$0xff]
    %v162 = vld [vmem:[%s1 + $0xa0] sm:$0xff]
    %v163 = vld [vmem:[%s1 + $0xa8] sm:$0xff]
    %v164 = vld [vmem:[%s1 + $0xb0] sm:$0xff]
    %v165 = vld [vmem:[%s1 + $0xb8] sm:$0xff]
    %v166 = vld [vmem:[%s1 + $0xc0] sm:$0xff]
    %v167 = vld [vmem:[%s1 + $0xc8] sm:$0xff]
    %v168 = vld [vmem:[%s1 + $0xd0] sm:$0xff]
    %v169 = vld [vmem:[%s1 + $0xd8] sm:$0xff]
    %v170 = vld [vmem:[%s1 + $0xe0] sm:$0xff]
    %v171 = vld [vmem:[%s1 + $0xe8] sm:$0xff]
    %v172 = vld [vmem:[%s1 + $0xf0] sm:$0xff]
    %v173 = vld [vmem:[%s1 + $0xf8] sm:$0xff]
    %v174 = vld [vmem:[%s1 + $0x100] sm:$0xff]
    %v175 = vld [vmem:[%s1 + $0x108] sm:$0xff]
    %v176 = vld [vmem:[%s1 + $0x110] sm:$0xff]
    %v177 = vld [vmem:[%s1 + $0x118] sm:$0xff]
    %v178 = vld [vmem:[%s1 + $0x120] sm:$0xff]
    %v179 = vld [vmem:[%s1 + $0x128] sm:$0xff]
    %v180 = vld [vmem:[%s1 + $0x130] sm:$0xff]
    %v181 = vld [vmem:[%s1 + $0x138] sm:$0xff]
    %v182 = vld [vmem:[%s1 + $0x140] sm:$0xff]
    %v183 = vld [vmem:[%s1 + $0x148] sm:$0xff]
    %v184 = vld [vmem:[%s1 + $0x150] sm:$0xff]
    %v185 = vld [vmem:[%s1 + $0x158] sm:$0xff]
    %v186 = vld [vmem:[%s1 + $0x160] sm:$0xff]
    %v187 = vld [vmem:[%s1 + $0x168] sm:$0xff]
    %v188 = vld [vmem:[%s1 + $0x170] sm:$0xff]
    %v189 = vld [vmem:[%s1 + $0x178] sm:$0xff]
    %v190 = vld [vmem:[%s1 + $0x180] sm:$0xff]
    %v191 = vld [vmem:[%s1 + $0x188] sm:$0xff]
    %v192 = vld [vmem:[%s1 + $0x190] sm:$0xff]
    %v193 = vld [vmem:[%s1 + $0x198] sm:$0xff]
    %v194 = vld [vmem:[%s1 + $0x1a0] sm:$0xff]
    %v195 = vld [vmem:[%s1 + $0x1a8] sm:$0xff]
    %v196 = vld [vmem:[%s1 + $0x1b0] sm:$0xff]
    %v197 = vld [vmem:[%s1 + $0x1b8] sm:$0xff]
    %v198 = vld [vmem:[%s1 + $0x1c0] sm:$0xff]
    %v199 = vld [vmem:[%s1 + $0x1c8] sm:$0xff]
    %v200 = vld [vmem:[%s1 + $0x1d0] sm:$0xff]
    %v201 = vld [vmem:[%s1 + $0x1d8] sm:$0xff]
    %v202 = vld [vmem:[%s1 + $0x1e0] sm:$0xff]
    %v203 = vld [vmem:[%s1 + $0x1e8] sm:$0xff]
    %v204 = vld [vmem:[%s1 + $0x1f0] sm:$0xff]
    %v205 = vld [vmem:[%s1 + $0x1f8] sm:$0xff]
    %vm206 = vcmask 64512
    %v208 = vsel %vm206, %v44, 0
    %v211 = vsel %vm206, %v45, 0
    %v214 = vsel %vm206, %v46, 0
    %v217 = vsel %vm206, %v47, 0
    %v220 = vsel %vm206, %v48, 0
    %v223 = vsel %vm206, %v49, 0
    %v226 = vsel %vm206, %v50, 0
    %v229 = vsel %vm206, %v51, 0
    %v232 = vsel %vm206, %v142, 0
    %v235 = vsel %vm206, %v143, 0
    %v238 = vsel %vm206, %v144, 0
    %v241 = vsel %vm206, %v145, 0
    %v244 = vsel %vm206, %v146, 0
    %v247 = vsel %vm206, %v147, 0
    %v250 = vsel %vm206, %v148, 0
    %v253 = vsel %vm206, %v149, 0
    %v256 = vsel %vm206, %v150, 0
    %v259 = vsel %vm206, %v151, 0
    %v262 = vsel %vm206, %v152, 0
    %v265 = vsel %vm206, %v153, 0
    %v268 = vsel %vm206, %v154, 0
    %v271 = vsel %vm206, %v155, 0
    %v274 = vsel %vm206, %v156, 0
    %v277 = vsel %vm206, %v157, 0
    %v280 = vsel %vm206, %v158, 0
    %v283 = vsel %vm206, %v159, 0
    %v286 = vsel %vm206, %v160, 0
    %v289 = vsel %vm206, %v161, 0
    %v292 = vsel %vm206, %v162, 0
    %v295 = vsel %vm206, %v163, 0
    %v298 = vsel %vm206, %v164, 0
    %v301 = vsel %vm206, %v165, 0
    %v304 = vsel %vm206, %v166, 0
    %v307 = vsel %vm206, %v167, 0
    %v310 = vsel %vm206, %v168, 0
    %v313 = vsel %vm206, %v169, 0
    %v316 = vsel %vm206, %v170, 0
    %v319 = vsel %vm206, %v171, 0
    %v322 = vsel %vm206, %v172, 0
    %v325 = vsel %vm206, %v173, 0
    %v328 = vsel %vm206, %v174, 0
    %v331 = vsel %vm206, %v175, 0
    %v334 = vsel %vm206, %v176, 0
    %v337 = vsel %vm206, %v177, 0
    %v340 = vsel %vm206, %v178, 0
    %v343 = vsel %vm206, %v179, 0
    %v346 = vsel %vm206, %v180, 0
    %v349 = vsel %vm206, %v181, 0
    %v352 = vsel %vm206, %v182, 0
    %v355 = vsel %vm206, %v183, 0
    %v358 = vsel %vm206, %v184, 0
    %v361 = vsel %vm206, %v185, 0
    %v364 = vsel %vm206, %v186, 0
    %v367 = vsel %vm206, %v187, 0
    %v370 = vsel %vm206, %v188, 0
    %v373 = vsel %vm206, %v189, 0
    %v376 = vsel %vm206, %v190, 0
    %v379 = vsel %vm206, %v191, 0
    %v382 = vsel %vm206, %v192, 0
    %v385 = vsel %vm206, %v193, 0
    %v388 = vsel %vm206, %v194, 0
    %v391 = vsel %vm206, %v195, 0
    %v394 = vsel %vm206, %v196, 0
    %v397 = vsel %vm206, %v197, 0
    %v400 = vsel %vm206, %v198, 0
    %v403 = vsel %vm206, %v199, 0
    %v406 = vsel %vm206, %v200, 0
    %v409 = vsel %vm206, %v201, 0
    %v412 = vsel %vm206, %v202, 0
    %v415 = vsel %vm206, %v203, 0
    %v418 = vsel %vm206, %v204, 0
    %v421 = vsel %vm206, %v205, 0
    %423 = vmatpush.xpose.msra.mxu0 %v277
    %424 = vmatpush.xpose.msra.mxu0 %v274
    %425 = vmatpush.xpose.msra.mxu0 %v271
    %426 = vmatpush.xpose.msra.mxu0 %v268
    %427 = vmatpush.xpose.msra.mxu0 %v265
    %428 = vmatpush.xpose.msra.mxu0 %v262
    %429 = vmatpush.xpose.msra.mxu0 %v259
    %430 = vmatpush.xpose.msra.mxu0 %v256
    %431 = vmatpush.xpose.msra.mxu0 %v253
    %432 = vmatpush.xpose.msra.mxu0 %v250
    %433 = vmatpush.xpose.msra.mxu0 %v247
    %434 = vmatpush.xpose.msra.mxu0 %v244
    %435 = vmatpush.xpose.msra.mxu0 %v241
    %436 = vmatpush.xpose.msra.mxu0 %v238
    %437 = vmatpush.xpose.msra.mxu0 %v235
    %438 = vmatpush.xpose.msra.mxu0 %v232
    %439 = vmatmul.f32.gmra.mxu0 %v208
    %v440 = vpop.f32.mrf.mxu0
    %v441 = vadd.f32 0.0, %v440
    %442 = vmatmul.f32.gmra.mxu0 %v211
    %v443 = vpop.f32.mrf.mxu0
    %v444 = vadd.f32 0.0, %v443
    %445 = vmatmul.f32.gmra.mxu0 %v214
    %v446 = vpop.f32.mrf.mxu0
    %v447 = vadd.f32 0.0, %v446
    %448 = vmatmul.f32.gmra.mxu0 %v217
    %v449 = vpop.f32.mrf.mxu0
    %v450 = vadd.f32 0.0, %v449
    %451 = vmatmul.f32.gmra.mxu0 %v220
    %v452 = vpop.f32.mrf.mxu0
    %v453 = vadd.f32 0.0, %v452
    %454 = vmatmul.f32.gmra.mxu0 %v223
    %v455 = vpop.f32.mrf.mxu0
    %v456 = vadd.f32 0.0, %v455
    %457 = vmatmul.f32.gmra.mxu0 %v226
    %v458 = vpop.f32.mrf.mxu0
    %v459 = vadd.f32 0.0, %v458
    %460 = vmatmul.f32.gmra.mxu0 %v229
    %v461 = vpop.f32.mrf.mxu0
    %v462 = vadd.f32 0.0, %v461
    %463 = vdwg.mxu0
    %464 = vmatpush.xpose.msra.mxu0 %v325
    %465 = vmatpush.xpose.msra.mxu0 %v322
    %466 = vmatpush.xpose.msra.mxu0 %v319
    %467 = vmatpush.xpose.msra.mxu0 %v316
    %468 = vmatpush.xpose.msra.mxu0 %v313
    %469 = vmatpush.xpose.msra.mxu0 %v310
    %470 = vmatpush.xpose.msra.mxu0 %v307
    %471 = vmatpush.xpose.msra.mxu0 %v304
    %472 = vmatpush.xpose.msra.mxu0 %v301
    %473 = vmatpush.xpose.msra.mxu0 %v298
    %474 = vmatpush.xpose.msra.mxu0 %v295
    %475 = vmatpush.xpose.msra.mxu0 %v292
    %476 = vmatpush.xpose.msra.mxu0 %v289
    %477 = vmatpush.xpose.msra.mxu0 %v286
    %478 = vmatpush.xpose.msra.mxu0 %v283
    %479 = vmatpush.xpose.msra.mxu0 %v280
    %480 = vmatmul.f32.gmra.mxu0 %v208
    %v481 = vpop.f32.mrf.mxu0
    %v482 = vadd.f32 0.0, %v481
    %483 = vmatmul.f32.gmra.mxu0 %v211
    %v484 = vpop.f32.mrf.mxu0
    %v485 = vadd.f32 0.0, %v484
    %486 = vmatmul.f32.gmra.mxu0 %v214
    %v487 = vpop.f32.mrf.mxu0
    %v488 = vadd.f32 0.0, %v487
    %489 = vmatmul.f32.gmra.mxu0 %v217
    %v490 = vpop.f32.mrf.mxu0
    %v491 = vadd.f32 0.0, %v490
    %492 = vmatmul.f32.gmra.mxu0 %v220
    %v493 = vpop.f32.mrf.mxu0
    %v494 = vadd.f32 0.0, %v493
    %495 = vmatmul.f32.gmra.mxu0 %v223
    %v496 = vpop.f32.mrf.mxu0
    %v497 = vadd.f32 0.0, %v496
    %498 = vmatmul.f32.gmra.mxu0 %v226
    %v499 = vpop.f32.mrf.mxu0
    %v500 = vadd.f32 0.0, %v499
    %501 = vmatmul.f32.gmra.mxu0 %v229
    %v502 = vpop.f32.mrf.mxu0
    %v503 = vadd.f32 0.0, %v502
    %504 = vdwg.mxu0
    %505 = vmatpush.xpose.msra.mxu0 %v373
    %506 = vmatpush.xpose.msra.mxu0 %v370
    %507 = vmatpush.xpose.msra.mxu0 %v367
    %508 = vmatpush.xpose.msra.mxu0 %v364
    %509 = vmatpush.xpose.msra.mxu0 %v361
    %510 = vmatpush.xpose.msra.mxu0 %v358
    %511 = vmatpush.xpose.msra.mxu0 %v355
    %512 = vmatpush.xpose.msra.mxu0 %v352
    %513 = vmatpush.xpose.msra.mxu0 %v349
    %514 = vmatpush.xpose.msra.mxu0 %v346
    %515 = vmatpush.xpose.msra.mxu0 %v343
    %516 = vmatpush.xpose.msra.mxu0 %v340
    %517 = vmatpush.xpose.msra.mxu0 %v337
    %518 = vmatpush.xpose.msra.mxu0 %v334
    %519 = vmatpush.xpose.msra.mxu0 %v331
    %520 = vmatpush.xpose.msra.mxu0 %v328
    %521 = vmatmul.f32.gmra.mxu0 %v208
    %v522 = vpop.f32.mrf.mxu0
    %v523 = vadd.f32 0.0, %v522
    %524 = vmatmul.f32.gmra.mxu0 %v211
    %v525 = vpop.f32.mrf.mxu0
    %v526 = vadd.f32 0.0, %v525
    %527 = vmatmul.f32.gmra.mxu0 %v214
    %v528 = vpop.f32.mrf.mxu0
    %v529 = vadd.f32 0.0, %v528
    %530 = vmatmul.f32.gmra.mxu0 %v217
    %v531 = vpop.f32.mrf.mxu0
    %v532 = vadd.f32 0.0, %v531
    %533 = vmatmul.f32.gmra.mxu0 %v220
    %v534 = vpop.f32.mrf.mxu0
    %v535 = vadd.f32 0.0, %v534
    %536 = vmatmul.f32.gmra.mxu0 %v223
    %v537 = vpop.f32.mrf.mxu0
    %v538 = vadd.f32 0.0, %v537
    %539 = vmatmul.f32.gmra.mxu0 %v226
    %v540 = vpop.f32.mrf.mxu0
    %v541 = vadd.f32 0.0, %v540
    %542 = vmatmul.f32.gmra.mxu0 %v229
    %v543 = vpop.f32.mrf.mxu0
    %v544 = vadd.f32 0.0, %v543
    %545 = vdwg.mxu0
    %546 = vmatpush.xpose.msra.mxu0 %v421
    %547 = vmatpush.xpose.msra.mxu0 %v418
    %548 = vmatpush.xpose.msra.mxu0 %v415
    %549 = vmatpush.xpose.msra.mxu0 %v412
    %550 = vmatpush.xpose.msra.mxu0 %v409
    %551 = vmatpush.xpose.msra.mxu0 %v406
    %552 = vmatpush.xpose.msra.mxu0 %v403
    %553 = vmatpush.xpose.msra.mxu0 %v400
    %554 = vmatpush.xpose.msra.mxu0 %v397
    %555 = vmatpush.xpose.msra.mxu0 %v394
    %556 = vmatpush.xpose.msra.mxu0 %v391
    %557 = vmatpush.xpose.msra.mxu0 %v388
    %558 = vmatpush.xpose.msra.mxu0 %v385
    %559 = vmatpush.xpose.msra.mxu0 %v382
    %560 = vmatpush.xpose.msra.mxu0 %v379
    %561 = vmatpush.xpose.msra.mxu0 %v376
    %562 = vmatmul.f32.gmra.mxu0 %v208
    %v563 = vpop.f32.mrf.mxu0
    %v564 = vadd.f32 0.0, %v563
    %565 = vmatmul.f32.gmra.mxu0 %v211
    %v566 = vpop.f32.mrf.mxu0
    %v567 = vadd.f32 0.0, %v566
    %568 = vmatmul.f32.gmra.mxu0 %v214
    %v569 = vpop.f32.mrf.mxu0
    %v570 = vadd.f32 0.0, %v569
    %571 = vmatmul.f32.gmra.mxu0 %v217
    %v572 = vpop.f32.mrf.mxu0
    %v573 = vadd.f32 0.0, %v572
    %574 = vmatmul.f32.gmra.mxu0 %v220
    %v575 = vpop.f32.mrf.mxu0
    %v576 = vadd.f32 0.0, %v575
    %577 = vmatmul.f32.gmra.mxu0 %v223
    %v578 = vpop.f32.mrf.mxu0
    %v579 = vadd.f32 0.0, %v578
    %580 = vmatmul.f32.gmra.mxu0 %v226
    %v581 = vpop.f32.mrf.mxu0
    %v582 = vadd.f32 0.0, %v581
    %583 = vmatmul.f32.gmra.mxu0 %v229
    %v584 = vpop.f32.mrf.mxu0
    %v585 = vadd.f32 0.0, %v584
    %586 = vdwg.mxu0
    %vm587 = vcmask 31744
    %v589 = vsel %vm587, %v36, 0
    %v592 = vsel %vm587, %v37, 0
    %v595 = vsel %vm587, %v38, 0
    %v598 = vsel %vm587, %v39, 0
    %v601 = vsel %vm587, %v40, 0
    %v604 = vsel %vm587, %v41, 0
    %v607 = vsel %vm587, %v42, 0
    %v610 = vsel %vm587, %v43, 0
    %v613 = vsel %vm587, %v78, 0
    %v616 = vsel %vm587, %v79, 0
    %v619 = vsel %vm587, %v80, 0
    %v622 = vsel %vm587, %v81, 0
    %v625 = vsel %vm587, %v82, 0
    %v628 = vsel %vm587, %v83, 0
    %v631 = vsel %vm587, %v84, 0
    %v634 = vsel %vm587, %v85, 0
    %v637 = vsel %vm587, %v86, 0
    %v640 = vsel %vm587, %v87, 0
    %v643 = vsel %vm587, %v88, 0
    %v646 = vsel %vm587, %v89, 0
    %v649 = vsel %vm587, %v90, 0
    %v652 = vsel %vm587, %v91, 0
    %v655 = vsel %vm587, %v92, 0
    %v658 = vsel %vm587, %v93, 0
    %v661 = vsel %vm587, %v94, 0
    %v664 = vsel %vm587, %v95, 0
    %v667 = vsel %vm587, %v96, 0
    %v670 = vsel %vm587, %v97, 0
    %v673 = vsel %vm587, %v98, 0
    %v676 = vsel %vm587, %v99, 0
    %v679 = vsel %vm587, %v100, 0
    %v682 = vsel %vm587, %v101, 0
    %v685 = vsel %vm587, %v102, 0
    %v688 = vsel %vm587, %v103, 0
    %v691 = vsel %vm587, %v104, 0
    %v694 = vsel %vm587, %v105, 0
    %v697 = vsel %vm587, %v106, 0
    %v700 = vsel %vm587, %v107, 0
    %v703 = vsel %vm587, %v108, 0
    %v706 = vsel %vm587, %v109, 0
    %v709 = vsel %vm587, %v110, 0
    %v712 = vsel %vm587, %v111, 0
    %v715 = vsel %vm587, %v112, 0
    %v718 = vsel %vm587, %v113, 0
    %v721 = vsel %vm587, %v114, 0
    %v724 = vsel %vm587, %v115, 0
    %v727 = vsel %vm587, %v116, 0
    %v730 = vsel %vm587, %v117, 0
    %v733 = vsel %vm587, %v118, 0
    %v736 = vsel %vm587, %v119, 0
    %v739 = vsel %vm587, %v120, 0
    %v742 = vsel %vm587, %v121, 0
    %v745 = vsel %vm587, %v122, 0
    %v748 = vsel %vm587, %v123, 0
    %v751 = vsel %vm587, %v124, 0
    %v754 = vsel %vm587, %v125, 0
    %v757 = vsel %vm587, %v126, 0
    %v760 = vsel %vm587, %v127, 0
    %v763 = vsel %vm587, %v128, 0
    %v766 = vsel %vm587, %v129, 0
    %v769 = vsel %vm587, %v130, 0
    %v772 = vsel %vm587, %v131, 0
    %v775 = vsel %vm587, %v132, 0
    %v778 = vsel %vm587, %v133, 0
    %v781 = vsel %vm587, %v134, 0
    %v784 = vsel %vm587, %v135, 0
    %v787 = vsel %vm587, %v136, 0
    %v790 = vsel %vm587, %v137, 0
    %v793 = vsel %vm587, %v138, 0
    %v796 = vsel %vm587, %v139, 0
    %v799 = vsel %vm587, %v140, 0
    %v802 = vsel %vm587, %v141, 0
    %804 = vmatpush.xpose.msra.mxu0 %v658
    %805 = vmatpush.xpose.msra.mxu0 %v655
    %806 = vmatpush.xpose.msra.mxu0 %v652
    %807 = vmatpush.xpose.msra.mxu0 %v649
    %808 = vmatpush.xpose.msra.mxu0 %v646
    %809 = vmatpush.xpose.msra.mxu0 %v643
    %810 = vmatpush.xpose.msra.mxu0 %v640
    %811 = vmatpush.xpose.msra.mxu0 %v637
    %812 = vmatpush.xpose.msra.mxu0 %v634
    %813 = vmatpush.xpose.msra.mxu0 %v631
    %814 = vmatpush.xpose.msra.mxu0 %v628
    %815 = vmatpush.xpose.msra.mxu0 %v625
    %816 = vmatpush.xpose.msra.mxu0 %v622
    %817 = vmatpush.xpose.msra.mxu0 %v619
    %818 = vmatpush.xpose.msra.mxu0 %v616
    %819 = vmatpush.xpose.msra.mxu0 %v613
    %820 = vmatmul.f32.gmra.mxu0 %v589
    %v821 = vpop.f32.mrf.mxu0
    %v822 = vadd.f32 %v441, %v821
    %823 = vmatmul.f32.gmra.mxu0 %v592
    %v824 = vpop.f32.mrf.mxu0
    %v825 = vadd.f32 %v444, %v824
    %826 = vmatmul.f32.gmra.mxu0 %v595
    %v827 = vpop.f32.mrf.mxu0
    %v828 = vadd.f32 %v447, %v827
    %829 = vmatmul.f32.gmra.mxu0 %v598
    %v830 = vpop.f32.mrf.mxu0
    %v831 = vadd.f32 %v450, %v830
    %832 = vmatmul.f32.gmra.mxu0 %v601
    %v833 = vpop.f32.mrf.mxu0
    %v834 = vadd.f32 %v453, %v833
    %835 = vmatmul.f32.gmra.mxu0 %v604
    %v836 = vpop.f32.mrf.mxu0
    %v837 = vadd.f32 %v456, %v836
    %838 = vmatmul.f32.gmra.mxu0 %v607
    %v839 = vpop.f32.mrf.mxu0
    %v840 = vadd.f32 %v459, %v839
    %841 = vmatmul.f32.gmra.mxu0 %v610
    %v842 = vpop.f32.mrf.mxu0
    %v843 = vadd.f32 %v462, %v842
    %844 = vdwg.mxu0
    %845 = vmatpush.xpose.msra.mxu0 %v706
    %846 = vmatpush.xpose.msra.mxu0 %v703
    %847 = vmatpush.xpose.msra.mxu0 %v700
    %848 = vmatpush.xpose.msra.mxu0 %v697
    %849 = vmatpush.xpose.msra.mxu0 %v694
    %850 = vmatpush.xpose.msra.mxu0 %v691
    %851 = vmatpush.xpose.msra.mxu0 %v688
    %852 = vmatpush.xpose.msra.mxu0 %v685
    %853 = vmatpush.xpose.msra.mxu0 %v682
    %854 = vmatpush.xpose.msra.mxu0 %v679
    %855 = vmatpush.xpose.msra.mxu0 %v676
    %856 = vmatpush.xpose.msra.mxu0 %v673
    %857 = vmatpush.xpose.msra.mxu0 %v670
    %858 = vmatpush.xpose.msra.mxu0 %v667
    %859 = vmatpush.xpose.msra.mxu0 %v664
    %860 = vmatpush.xpose.msra.mxu0 %v661
    %861 = vmatmul.f32.gmra.mxu0 %v589
    %v862 = vpop.f32.mrf.mxu0
    %v863 = vadd.f32 %v482, %v862
    %864 = vmatmul.f32.gmra.mxu0 %v592
    %v865 = vpop.f32.mrf.mxu0
    %v866 = vadd.f32 %v485, %v865
    %867 = vmatmul.f32.gmra.mxu0 %v595
    %v868 = vpop.f32.mrf.mxu0
    %v869 = vadd.f32 %v488, %v868
    %870 = vmatmul.f32.gmra.mxu0 %v598
    %v871 = vpop.f32.mrf.mxu0
    %v872 = vadd.f32 %v491, %v871
    %873 = vmatmul.f32.gmra.mxu0 %v601
    %v874 = vpop.f32.mrf.mxu0
    %v875 = vadd.f32 %v494, %v874
    %876 = vmatmul.f32.gmra.mxu0 %v604
    %v877 = vpop.f32.mrf.mxu0
    %v878 = vadd.f32 %v497, %v877
    %879 = vmatmul.f32.gmra.mxu0 %v607
    %v880 = vpop.f32.mrf.mxu0
    %v881 = vadd.f32 %v500, %v880
    %882 = vmatmul.f32.gmra.mxu0 %v610
    %v883 = vpop.f32.mrf.mxu0
    %v884 = vadd.f32 %v503, %v883
    %885 = vdwg.mxu0
    %886 = vmatpush.xpose.msra.mxu0 %v754
    %887 = vmatpush.xpose.msra.mxu0 %v751
    %888 = vmatpush.xpose.msra.mxu0 %v748
    %889 = vmatpush.xpose.msra.mxu0 %v745
    %890 = vmatpush.xpose.msra.mxu0 %v742
    %891 = vmatpush.xpose.msra.mxu0 %v739
    %892 = vmatpush.xpose.msra.mxu0 %v736
    %893 = vmatpush.xpose.msra.mxu0 %v733
    %894 = vmatpush.xpose.msra.mxu0 %v730
    %895 = vmatpush.xpose.msra.mxu0 %v727
    %896 = vmatpush.xpose.msra.mxu0 %v724
    %897 = vmatpush.xpose.msra.mxu0 %v721
    %898 = vmatpush.xpose.msra.mxu0 %v718
    %899 = vmatpush.xpose.msra.mxu0 %v715
    %900 = vmatpush.xpose.msra.mxu0 %v712
    %901 = vmatpush.xpose.msra.mxu0 %v709
    %902 = vmatmul.f32.gmra.mxu0 %v589
    %v903 = vpop.f32.mrf.mxu0
    %v904 = vadd.f32 %v523, %v903
    %905 = vmatmul.f32.gmra.mxu0 %v592
    %v906 = vpop.f32.mrf.mxu0
    %v907 = vadd.f32 %v526, %v906
    %908 = vmatmul.f32.gmra.mxu0 %v595
    %v909 = vpop.f32.mrf.mxu0
    %v910 = vadd.f32 %v529, %v909
    %911 = vmatmul.f32.gmra.mxu0 %v598
    %v912 = vpop.f32.mrf.mxu0
    %v913 = vadd.f32 %v532, %v912
    %914 = vmatmul.f32.gmra.mxu0 %v601
    %v915 = vpop.f32.mrf.mxu0
    %v916 = vadd.f32 %v535, %v915
    %917 = vmatmul.f32.gmra.mxu0 %v604
    %v918 = vpop.f32.mrf.mxu0
    %v919 = vadd.f32 %v538, %v918
    %920 = vmatmul.f32.gmra.mxu0 %v607
    %v921 = vpop.f32.mrf.mxu0
    %v922 = vadd.f32 %v541, %v921
    %923 = vmatmul.f32.gmra.mxu0 %v610
    %v924 = vpop.f32.mrf.mxu0
    %v925 = vadd.f32 %v544, %v924
    %926 = vdwg.mxu0
    %927 = vmatpush.xpose.msra.mxu0 %v802
    %928 = vmatpush.xpose.msra.mxu0 %v799
    %929 = vmatpush.xpose.msra.mxu0 %v796
    %930 = vmatpush.xpose.msra.mxu0 %v793
    %931 = vmatpush.xpose.msra.mxu0 %v790
    %932 = vmatpush.xpose.msra.mxu0 %v787
    %933 = vmatpush.xpose.msra.mxu0 %v784
    %934 = vmatpush.xpose.msra.mxu0 %v781
    %935 = vmatpush.xpose.msra.mxu0 %v778
    %936 = vmatpush.xpose.msra.mxu0 %v775
    %937 = vmatpush.xpose.msra.mxu0 %v772
    %938 = vmatpush.xpose.msra.mxu0 %v769
    %939 = vmatpush.xpose.msra.mxu0 %v766
    %940 = vmatpush.xpose.msra.mxu0 %v763
    %941 = vmatpush.xpose.msra.mxu0 %v760
    %942 = vmatpush.xpose.msra.mxu0 %v757
    %943 = vmatmul.f32.gmra.mxu0 %v589
    %v944 = vpop.f32.mrf.mxu0
    %v945 = vadd.f32 %v564, %v944
    %946 = vmatmul.f32.gmra.mxu0 %v592
    %v947 = vpop.f32.mrf.mxu0
    %v948 = vadd.f32 %v567, %v947
    %949 = vmatmul.f32.gmra.mxu0 %v595
    %v950 = vpop.f32.mrf.mxu0
    %v951 = vadd.f32 %v570, %v950
    %952 = vmatmul.f32.gmra.mxu0 %v598
    %v953 = vpop.f32.mrf.mxu0
    %v954 = vadd.f32 %v573, %v953
    %955 = vmatmul.f32.gmra.mxu0 %v601
    %v956 = vpop.f32.mrf.mxu0
    %v957 = vadd.f32 %v576, %v956
    %958 = vmatmul.f32.gmra.mxu0 %v604
    %v959 = vpop.f32.mrf.mxu0
    %v960 = vadd.f32 %v579, %v959
    %961 = vmatmul.f32.gmra.mxu0 %v607
    %v962 = vpop.f32.mrf.mxu0
    %v963 = vadd.f32 %v582, %v962
    %964 = vmatmul.f32.gmra.mxu0 %v610
    %v965 = vpop.f32.mrf.mxu0
    %v966 = vadd.f32 %v585, %v965
    %967 = vdwg.mxu0
    %969 = vset.pattern.permute.xlu0 0
    %970 = vperm.xlu0 %969, %v70
    %v971 = vpop.permute.xlu0 %970
    %974 = vset.pattern.permute.xlu0 0
    %975 = vperm.xlu0 %974, %v71
    %v976 = vpop.permute.xlu0 %975
    %979 = vset.pattern.permute.xlu0 0
    %980 = vperm.xlu0 %979, %v72
    %v981 = vpop.permute.xlu0 %980
    %984 = vset.pattern.permute.xlu0 0
    %985 = vperm.xlu0 %984, %v73
    %v986 = vpop.permute.xlu0 %985
    %989 = vset.pattern.permute.xlu0 0
    %990 = vperm.xlu0 %989, %v74
    %v991 = vpop.permute.xlu0 %990
    %994 = vset.pattern.permute.xlu0 0
    %995 = vperm.xlu0 %994, %v75
    %v996 = vpop.permute.xlu0 %995
    %999 = vset.pattern.permute.xlu0 0
    %1000 = vperm.xlu0 %999, %v76
    %v1001 = vpop.permute.xlu0 %1000
    %1004 = vset.pattern.permute.xlu0 0
    %1005 = vperm.xlu0 %1004, %v77
    %v1006 = vpop.permute.xlu0 %1005
    %v1008 = vadd.f32 %v822, %v971
    %v1009 = vadd.f32 %v863, %v971
    %v1010 = vadd.f32 %v904, %v971
    %v1011 = vadd.f32 %v945, %v971
    %v1012 = vadd.f32 %v825, %v976
    %v1013 = vadd.f32 %v866, %v976
    %v1014 = vadd.f32 %v907, %v976
    %v1015 = vadd.f32 %v948, %v976
    %v1016 = vadd.f32 %v828, %v981
    %v1017 = vadd.f32 %v869, %v981
    %v1018 = vadd.f32 %v910, %v981
    %v1019 = vadd.f32 %v951, %v981
    %v1020 = vadd.f32 %v831, %v986
    %v1021 = vadd.f32 %v872, %v986
    %v1022 = vadd.f32 %v913, %v986
    %v1023 = vadd.f32 %v954, %v986
    %v1024 = vadd.f32 %v834, %v991
    %v1025 = vadd.f32 %v875, %v991
    %v1026 = vadd.f32 %v916, %v991
    %v1027 = vadd.f32 %v957, %v991
    %v1028 = vadd.f32 %v837, %v996
    %v1029 = vadd.f32 %v878, %v996
    %v1030 = vadd.f32 %v919, %v996
    %v1031 = vadd.f32 %v960, %v996
    %v1032 = vadd.f32 %v840, %v1001
    %v1033 = vadd.f32 %v881, %v1001
    %v1034 = vadd.f32 %v922, %v1001
    %v1035 = vadd.f32 %v963, %v1001
    %v1036 = vadd.f32 %v843, %v1006
    %v1037 = vadd.f32 %v884, %v1006
    %v1038 = vadd.f32 %v925, %v1006
    %v1039 = vadd.f32 %v966, %v1006
    %v1040 = vmax.f32 %v1008, 0.0
    %v1041 = vmax.f32 %v1009, 0.0
    %v1042 = vmax.f32 %v1010, 0.0
    %v1043 = vmax.f32 %v1011, 0.0
    %v1044 = vmax.f32 %v1012, 0.0
    %v1045 = vmax.f32 %v1013, 0.0
    %v1046 = vmax.f32 %v1014, 0.0
    %v1047 = vmax.f32 %v1015, 0.0
    %v1048 = vmax.f32 %v1016, 0.0
    %v1049 = vmax.f32 %v1017, 0.0
    %v1050 = vmax.f32 %v1018, 0.0
    %v1051 = vmax.f32 %v1019, 0.0
    %v1052 = vmax.f32 %v1020, 0.0
    %v1053 = vmax.f32 %v1021, 0.0
    %v1054 = vmax.f32 %v1022, 0.0
    %v1055 = vmax.f32 %v1023, 0.0
    %v1056 = vmax.f32 %v1024, 0.0
    %v1057 = vmax.f32 %v1025, 0.0
    %v1058 = vmax.f32 %v1026, 0.0
    %v1059 = vmax.f32 %v1027, 0.0
    %v1060 = vmax.f32 %v1028, 0.0
    %v1061 = vmax.f32 %v1029, 0.0
    %v1062 = vmax.f32 %v1030, 0.0
    %v1063 = vmax.f32 %v1031, 0.0
    %v1064 = vmax.f32 %v1032, 0.0
    %v1065 = vmax.f32 %v1033, 0.0
    %v1066 = vmax.f32 %v1034, 0.0
    %v1067 = vmax.f32 %v1035, 0.0
    %v1068 = vmax.f32 %v1036, 0.0
    %v1069 = vmax.f32 %v1037, 0.0
    %v1070 = vmax.f32 %v1038, 0.0
    %v1071 = vmax.f32 %v1039, 0.0
    %v1072 = vpack.c.bf16 %v1044, %v1040
    %v1073 = vpack.c.bf16 %v1045, %v1041
    %v1074 = vpack.c.bf16 %v1046, %v1042
    %v1075 = vpack.c.bf16 %v1047, %v1043
    %v1076 = vpack.c.bf16 %v1052, %v1048
    %v1077 = vpack.c.bf16 %v1053, %v1049
    %v1078 = vpack.c.bf16 %v1054, %v1050
    %v1079 = vpack.c.bf16 %v1055, %v1051
    %v1080 = vpack.c.bf16 %v1060, %v1056
    %v1081 = vpack.c.bf16 %v1061, %v1057
    %v1082 = vpack.c.bf16 %v1062, %v1058
    %v1083 = vpack.c.bf16 %v1063, %v1059
    %v1084 = vpack.c.bf16 %v1068, %v1064
    %v1085 = vpack.c.bf16 %v1069, %v1065
    %v1086 = vpack.c.bf16 %v1070, %v1066
    %v1087 = vpack.c.bf16 %v1071, %v1067
    %1089 = vset.pattern.permute.xlu0 0
    %1090 = vperm.xlu0 %1089, %v60
    %v1091 = vpop.permute.xlu0 %1090
    %1094 = vset.pattern.permute.xlu0 0
    %1095 = vperm.xlu0 %1094, %v61
    %v1096 = vpop.permute.xlu0 %1095
    %1099 = vset.pattern.permute.xlu0 0
    %1100 = vperm.xlu0 %1099, %v62
    %v1101 = vpop.permute.xlu0 %1100
    %1104 = vset.pattern.permute.xlu0 0
    %1105 = vperm.xlu0 %1104, %v63
    %v1106 = vpop.permute.xlu0 %1105
    %1109 = vset.pattern.permute.xlu0 0
    %1110 = vperm.xlu0 %1109, %v64
    %v1111 = vpop.permute.xlu0 %1110
    %1114 = vset.pattern.permute.xlu0 0
    %1115 = vperm.xlu0 %1114, %v65
    %v1116 = vpop.permute.xlu0 %1115
    %1119 = vset.pattern.permute.xlu0 0
    %1120 = vperm.xlu0 %1119, %v66
    %v1121 = vpop.permute.xlu0 %1120
    %1124 = vset.pattern.permute.xlu0 0
    %1125 = vperm.xlu0 %1124, %v67
    %v1126 = vpop.permute.xlu0 %1125
    %v1136 = vunpack.c.l.b16 %v52
    %v1137 = vunpack.c.l.b16 %v53
    %v1138 = vunpack.c.l.b16 %v54
    %v1139 = vunpack.c.l.b16 %v55
    %v1140 = vunpack.c.l.b16 %v56
    %v1141 = vunpack.c.l.b16 %v57
    %v1142 = vunpack.c.l.b16 %v58
    %v1143 = vunpack.c.l.b16 %v59
    %v1144 = vpack.c.b16 %v1137, %v1136
    %v1145 = vpack.c.b16 %v1139, %v1138
    %v1146 = vpack.c.b16 %v1141, %v1140
    %v1147 = vpack.c.b16 %v1143, %v1142
    %vm1148 = vcmask 523264
    %v1150 = vsel %vm1148, %v1144, 0
    %v1153 = vsel %vm1148, %v1145, 0
    %v1156 = vsel %vm1148, %v1146, 0
    %v1159 = vsel %vm1148, %v1147, 0
    %1161 = vmatpush.bf16.msra.mxu0 0
    %1162 = vmatpush.bf16.msra.mxu0 0
    %1163 = vmatpush.bf16.msra.mxu0 0
    %1164 = vmatpush.bf16.msra.mxu0 0
    %1165 = vmatpush.bf16.msra.mxu0 %v1084
    %1166 = vmatpush.bf16.msra.mxu0 %v1080
    %1167 = vmatpush.bf16.msra.mxu0 %v1076
    %1168 = vmatpush.bf16.msra.mxu0 %v1072
    %1169 = vmatmul.bf16.gmra.mxu0 %v1150
    %v1170 = vpop.f32.mrf.mxu0
    %v1171 = vadd.f32 %v1091, %v1170
    %v1172 = vpop.f32.mrf.mxu0
    %v1173 = vadd.f32 %v1096, %v1172
    %1174 = vmatmul.bf16.gmra.mxu0 %v1153
    %v1175 = vpop.f32.mrf.mxu0
    %v1176 = vadd.f32 %v1101, %v1175
    %v1177 = vpop.f32.mrf.mxu0
    %v1178 = vadd.f32 %v1106, %v1177
    %1179 = vmatmul.bf16.gmra.mxu0 %v1156
    %v1180 = vpop.f32.mrf.mxu0
    %v1181 = vadd.f32 %v1111, %v1180
    %v1182 = vpop.f32.mrf.mxu0
    %v1183 = vadd.f32 %v1116, %v1182
    %1184 = vmatmul.bf16.gmra.mxu0 %v1159
    %v1185 = vpop.f32.mrf.mxu0
    %v1186 = vadd.f32 %v1121, %v1185
    %v1187 = vpop.f32.mrf.mxu0
    %v1188 = vadd.f32 %v1126, %v1187
    %1189 = vdwg.mxu0
    %1190 = vmatpush.bf16.msra.mxu0 0
    %1191 = vmatpush.bf16.msra.mxu0 0
    %1192 = vmatpush.bf16.msra.mxu0 0
    %1193 = vmatpush.bf16.msra.mxu0 0
    %1194 = vmatpush.bf16.msra.mxu0 %v1085
    %1195 = vmatpush.bf16.msra.mxu0 %v1081
    %1196 = vmatpush.bf16.msra.mxu0 %v1077
    %1197 = vmatpush.bf16.msra.mxu0 %v1073
    %1198 = vmatmul.bf16.gmra.mxu0 %v1150
    %v1199 = vpop.f32.mrf.mxu0
    %v1200 = vadd.f32 %v1091, %v1199
    %v1201 = vpop.f32.mrf.mxu0
    %v1202 = vadd.f32 %v1096, %v1201
    %1203 = vmatmul.bf16.gmra.mxu0 %v1153
    %v1204 = vpop.f32.mrf.mxu0
    %v1205 = vadd.f32 %v1101, %v1204
    %v1206 = vpop.f32.mrf.mxu0
    %v1207 = vadd.f32 %v1106, %v1206
    %1208 = vmatmul.bf16.gmra.mxu0 %v1156
    %v1209 = vpop.f32.mrf.mxu0
    %v1210 = vadd.f32 %v1111, %v1209
    %v1211 = vpop.f32.mrf.mxu0
    %v1212 = vadd.f32 %v1116, %v1211
    %1213 = vmatmul.bf16.gmra.mxu0 %v1159
    %v1214 = vpop.f32.mrf.mxu0
    %v1215 = vadd.f32 %v1121, %v1214
    %v1216 = vpop.f32.mrf.mxu0
    %v1217 = vadd.f32 %v1126, %v1216
    %1218 = vdwg.mxu0
    %1219 = vmatpush.bf16.msra.mxu0 0
    %1220 = vmatpush.bf16.msra.mxu0 0
    %1221 = vmatpush.bf16.msra.mxu0 0
    %1222 = vmatpush.bf16.msra.mxu0 0
    %1223 = vmatpush.bf16.msra.mxu0 %v1086
    %1224 = vmatpush.bf16.msra.mxu0 %v1082
    %1225 = vmatpush.bf16.msra.mxu0 %v1078
    %1226 = vmatpush.bf16.msra.mxu0 %v1074
    %1227 = vmatmul.bf16.gmra.mxu0 %v1150
    %v1228 = vpop.f32.mrf.mxu0
    %v1229 = vadd.f32 %v1091, %v1228
    %v1230 = vpop.f32.mrf.mxu0
    %v1231 = vadd.f32 %v1096, %v1230
    %1232 = vmatmul.bf16.gmra.mxu0 %v1153
    %v1233 = vpop.f32.mrf.mxu0
    %v1234 = vadd.f32 %v1101, %v1233
    %v1235 = vpop.f32.mrf.mxu0
    %v1236 = vadd.f32 %v1106, %v1235
    %1237 = vmatmul.bf16.gmra.mxu0 %v1156
    %v1238 = vpop.f32.mrf.mxu0
    %v1239 = vadd.f32 %v1111, %v1238
    %v1240 = vpop.f32.mrf.mxu0
    %v1241 = vadd.f32 %v1116, %v1240
    %1242 = vmatmul.bf16.gmra.mxu0 %v1159
    %v1243 = vpop.f32.mrf.mxu0
    %v1244 = vadd.f32 %v1121, %v1243
    %v1245 = vpop.f32.mrf.mxu0
    %v1246 = vadd.f32 %v1126, %v1245
    %1247 = vdwg.mxu0
    %1248 = vmatpush.bf16.msra.mxu0 0
    %1249 = vmatpush.bf16.msra.mxu0 0
    %1250 = vmatpush.bf16.msra.mxu0 0
    %1251 = vmatpush.bf16.msra.mxu0 0
    %1252 = vmatpush.bf16.msra.mxu0 %v1087
    %1253 = vmatpush.bf16.msra.mxu0 %v1083
    %1254 = vmatpush.bf16.msra.mxu0 %v1079
    %1255 = vmatpush.bf16.msra.mxu0 %v1075
    %1256 = vmatmul.bf16.gmra.mxu0 %v1150
    %v1257 = vpop.f32.mrf.mxu0
    %v1258 = vadd.f32 %v1091, %v1257
    %v1259 = vpop.f32.mrf.mxu0
    %v1260 = vadd.f32 %v1096, %v1259
    %1261 = vmatmul.bf16.gmra.mxu0 %v1153
    %v1262 = vpop.f32.mrf.mxu0
    %v1263 = vadd.f32 %v1101, %v1262
    %v1264 = vpop.f32.mrf.mxu0
    %v1265 = vadd.f32 %v1106, %v1264
    %1266 = vmatmul.bf16.gmra.mxu0 %v1156
    %v1267 = vpop.f32.mrf.mxu0
    %v1268 = vadd.f32 %v1111, %v1267
    %v1269 = vpop.f32.mrf.mxu0
    %v1270 = vadd.f32 %v1116, %v1269
    %1271 = vmatmul.bf16.gmra.mxu0 %v1159
    %v1272 = vpop.f32.mrf.mxu0
    %v1273 = vadd.f32 %v1121, %v1272
    %v1274 = vpop.f32.mrf.mxu0
    %v1275 = vadd.f32 %v1126, %v1274
    %1276 = vdwg.mxu0
    %v1277 = vmax.f32 %v1171, 0.0
    %v1278 = vmax.f32 %v1200, 0.0
    %v1279 = vmax.f32 %v1229, 0.0
    %v1280 = vmax.f32 %v1258, 0.0
    %v1281 = vmax.f32 %v1173, 0.0
    %v1282 = vmax.f32 %v1202, 0.0
    %v1283 = vmax.f32 %v1231, 0.0
    %v1284 = vmax.f32 %v1260, 0.0
    %v1285 = vmax.f32 %v1176, 0.0
    %v1286 = vmax.f32 %v1205, 0.0
    %v1287 = vmax.f32 %v1234, 0.0
    %v1288 = vmax.f32 %v1263, 0.0
    %v1289 = vmax.f32 %v1178, 0.0
    %v1290 = vmax.f32 %v1207, 0.0
    %v1291 = vmax.f32 %v1236, 0.0
    %v1292 = vmax.f32 %v1265, 0.0
    %v1293 = vmax.f32 %v1181, 0.0
    %v1294 = vmax.f32 %v1210, 0.0
    %v1295 = vmax.f32 %v1239, 0.0
    %v1296 = vmax.f32 %v1268, 0.0
    %v1297 = vmax.f32 %v1183, 0.0
    %v1298 = vmax.f32 %v1212, 0.0
    %v1299 = vmax.f32 %v1241, 0.0
    %v1300 = vmax.f32 %v1270, 0.0
    %v1301 = vmax.f32 %v1186, 0.0
    %v1302 = vmax.f32 %v1215, 0.0
    %v1303 = vmax.f32 %v1244, 0.0
    %v1304 = vmax.f32 %v1273, 0.0
    %v1305 = vmax.f32 %v1188, 0.0
    %v1306 = vmax.f32 %v1217, 0.0
    %v1307 = vmax.f32 %v1246, 0.0
    %v1308 = vmax.f32 %v1275, 0.0
    %v1309 = vpack.c.bf16 %v1281, %v1277
    %v1310 = vpack.c.bf16 %v1282, %v1278
    %v1311 = vpack.c.bf16 %v1283, %v1279
    %v1312 = vpack.c.bf16 %v1284, %v1280
    %v1313 = vpack.c.bf16 %v1289, %v1285
    %v1314 = vpack.c.bf16 %v1290, %v1286
    %v1315 = vpack.c.bf16 %v1291, %v1287
    %v1316 = vpack.c.bf16 %v1292, %v1288
    %v1317 = vpack.c.bf16 %v1297, %v1293
    %v1318 = vpack.c.bf16 %v1298, %v1294
    %v1319 = vpack.c.bf16 %v1299, %v1295
    %v1320 = vpack.c.bf16 %v1300, %v1296
    %v1321 = vpack.c.bf16 %v1305, %v1301
    %v1322 = vpack.c.bf16 %v1306, %v1302
    %v1323 = vpack.c.bf16 %v1307, %v1303
    %v1324 = vpack.c.bf16 %v1308, %v1304
    %1326 = vset.pattern.permute.xlu0 0
    %1327 = vperm.xlu0 %1326, %v69
    %v1328 = vpop.permute.xlu0 %1327
    %v1330 = vperm.slane %v1328, 0
    %v1332 = vsel %vm1148, %v68, 0
    %1334 = vmatpush.bf16.msra.mxu0 0
    %1335 = vmatpush.bf16.msra.mxu0 0
    %1336 = vmatpush.bf16.msra.mxu0 0
    %1337 = vmatpush.bf16.msra.mxu0 0
    %1338 = vmatpush.bf16.msra.mxu0 %v1321
    %1339 = vmatpush.bf16.msra.mxu0 %v1317
    %1340 = vmatpush.bf16.msra.mxu0 %v1313
    %1341 = vmatpush.bf16.msra.mxu0 %v1309
    %1342 = vmatmul.bf16.gmra.mxu0 %v1332
    %v1343 = vpop.f32.mrf.mxu0
    %v1344 = vadd.f32 %v1330, %v1343
    %v1345 = vpop.f32.mrf.mxu0
    %1346 = vdwg.mxu0
    %1347 = vmatpush.bf16.msra.mxu0 0
    %1348 = vmatpush.bf16.msra.mxu0 0
    %1349 = vmatpush.bf16.msra.mxu0 0
    %1350 = vmatpush.bf16.msra.mxu0 0
    %1351 = vmatpush.bf16.msra.mxu0 %v1322
    %1352 = vmatpush.bf16.msra.mxu0 %v1318
    %1353 = vmatpush.bf16.msra.mxu0 %v1314
    %1354 = vmatpush.bf16.msra.mxu0 %v1310
    %1355 = vmatmul.bf16.gmra.mxu0 %v1332
    %v1356 = vpop.f32.mrf.mxu0
    %v1357 = vadd.f32 %v1330, %v1356
    %v1358 = vpop.f32.mrf.mxu0
    %1359 = vdwg.mxu0
    %1360 = vmatpush.bf16.msra.mxu0 0
    %1361 = vmatpush.bf16.msra.mxu0 0
    %1362 = vmatpush.bf16.msra.mxu0 0
    %1363 = vmatpush.bf16.msra.mxu0 0
    %1364 = vmatpush.bf16.msra.mxu0 %v1323
    %1365 = vmatpush.bf16.msra.mxu0 %v1319
    %1366 = vmatpush.bf16.msra.mxu0 %v1315
    %1367 = vmatpush.bf16.msra.mxu0 %v1311
    %1368 = vmatmul.bf16.gmra.mxu0 %v1332
    %v1369 = vpop.f32.mrf.mxu0
    %v1370 = vadd.f32 %v1330, %v1369
    %v1371 = vpop.f32.mrf.mxu0
    %1372 = vdwg.mxu0
    %1373 = vmatpush.bf16.msra.mxu0 0
    %1374 = vmatpush.bf16.msra.mxu0 0
    %1375 = vmatpush.bf16.msra.mxu0 0
    %1376 = vmatpush.bf16.msra.mxu0 0
    %1377 = vmatpush.bf16.msra.mxu0 %v1324
    %1378 = vmatpush.bf16.msra.mxu0 %v1320
    %1379 = vmatpush.bf16.msra.mxu0 %v1316
    %1380 = vmatpush.bf16.msra.mxu0 %v1312
    %1381 = vmatmul.bf16.gmra.mxu0 %v1332
    %v1382 = vpop.f32.mrf.mxu0
    %v1383 = vadd.f32 %v1330, %v1382
    %v1384 = vpop.f32.mrf.mxu0
    %1385 = vdwg.mxu0
    %v1390 = vrot.slane %v1357, 7
    %v1391 = vrot.slane %v1370, 6
    %v1392 = vrot.slane %v1383, 5
    %vm1393 = vcmask 1040384
    %v1394 = vsel %vm1393, %v1344, %v1390
    %vm1395 = vcmask 1042434
    %v1396 = vsel %vm1395, %v1391, %v1392
    %vm1397 = vcmask 1041408
    %v1398 = vsel %vm1397, %v1394, %v1396
    %v1400 = vlaneseq
    %vm1401 = vcmp.ge.s32.totalorder %v1400, 0
    %vm1402 = vcmp.lt.s32.totalorder %v1400, 512
    %vm1403 = vmand %vm1401, %vm1402
    %1404 = vst.msk [vmem:[#allocation3] sm:$0xf] %vm1403, %v1398
    // Predicated region
    $region38: #{tpu_custom_call.1} parent=1 // pred_check
      _
    $region39: #{tpu_custom_call.1} parent=1 // pred_check_branch
      %1406 = sbr.rel (0) target = $region41
    $region40: #{tpu_custom_call.1} parent=1 // pred_region
      %1408 = vsyncadd [#allocation4], 0
      %s1410 = sshll.u32 [#allocation3], 4
      %s1411 = int_to_ptr.vmem [resolvable:$true] %s1410
      %s1412 = sshll.u32 %s9, 4
      %s1413 = int_to_ptr.hbm [resolvable:$true] %s1412
      %1415 = dma.vmem_to_hbm [thread:$0]  %s1411, 64, %s1413, [#allocation4]
    $region41: #{tpu_custom_call.1} parent=1 // pred_fallthru
      _
    // Predicated region
    $region42: #{tpu_custom_call.1} parent=1 // pred_check
      _
    $region43: #{tpu_custom_call.1} parent=1 // pred_check_branch
      %1417 = sbr.rel (0) target = $region45
    $region44: #{tpu_custom_call.1} parent=1 // pred_region
      %1419 = dma.done [#allocation4], 64
    $region45: #{tpu_custom_call.1} parent=1 // pred_fallthru
      _
    %1420 = vsyncpa [#allocation4], 1

</llo_original>
